<compile_context>
chip_gen: v6e
topology: v6e:2x2x1
jax: 0.10.0
libtpu: 0.0.40
codegen_flags: <defaults>
</compile_context>

<pallas_src>
import functools

import jax
import jax.numpy as jnp
from jax.experimental import pallas as pl
from jax.experimental.pallas import tpu as pltpu


# ----------------------------------------------------------------------------
# Kernels
# ----------------------------------------------------------------------------
def _dishts_fwd_kernel(x_ref, w0_ref, ab_ref, o_ref, *, inv_ts, activate):
    """Forward hot path: normalized y only (no inverse-path stats)."""
    x = x_ref[...]                                   # (Bt, L, N)
    w0 = w0_ref[...]                                 # (L, N)

    phil = jnp.sum(x * w0, axis=1, keepdims=True)    # (Bt, 1, N)
    if activate:
        phil = jax.nn.gelu(phil, approximate=False)  # exact erf, only (Bt,1,N)

    dl = x - phil                                    # (Bt, L, N)
    xil = jnp.sum(dl * dl, axis=1, keepdims=True) * inv_ts        # (Bt, 1, N)

    a = ab_ref[0:1, :]                               # (1, N)
    b = ab_ref[1:2, :]                               # (1, N)
    scale = jax.lax.rsqrt(xil + 1e-8) * a            # (Bt, 1, N)  (EUP rsqrt)
    o_ref[...] = (dl * scale + b).astype(o_ref.dtype)


def _dishts_fwd_stats_kernel(x_ref, w_ref, ab_ref, o_ref, stats_ref,
                             *, inv_ts, activate):
    """Forward + packed (phil, phih, xil, xih) stats for the inverse path."""
    x = x_ref[...]                                   # (Bt, L, N)
    w0 = w_ref[0]                                    # (L, N)
    w1 = w_ref[1]                                    # (L, N)

    phil = jnp.sum(x * w0, axis=1, keepdims=True)    # (Bt, 1, N)
    phih = jnp.sum(x * w1, axis=1, keepdims=True)
    if activate:
        phil = jax.nn.gelu(phil, approximate=False)
        phih = jax.nn.gelu(phih, approximate=False)

    dl = x - phil
    dh = x - phih
    xil = jnp.sum(dl * dl, axis=1, keepdims=True) * inv_ts
    xih = jnp.sum(dh * dh, axis=1, keepdims=True) * inv_ts

    a = ab_ref[0:1, :]
    b = ab_ref[1:2, :]
    scale = jax.lax.rsqrt(xil + 1e-8) * a
    o_ref[...] = (dl * scale + b).astype(o_ref.dtype)

    # Single packed stats slab (Bt, 4, N): phil | phih | xil | xih.
    stats_ref[:, 0:1, :] = phil.astype(stats_ref.dtype)
    stats_ref[:, 1:2, :] = phih.astype(stats_ref.dtype)
    stats_ref[:, 2:3, :] = xil.astype(stats_ref.dtype)
    stats_ref[:, 3:4, :] = xih.astype(stats_ref.dtype)


def _dishts_inv_kernel(x_ref, phih_ref, xih_ref, ab_ref, o_ref):
    """Inverse (denormalize) path: x = (y - b)/a * sqrt(xih+1e-8) + phih."""
    x = x_ref[...]                                   # (Bt, H, N)
    phih = phih_ref[...]                             # (Bt, 1, N)
    xih = xih_ref[...]                               # (Bt, 1, N)

    a = ab_ref[0:1, :]                               # (1, N)
    b = ab_ref[1:2, :]                               # (1, N)
    # Fold everything per-feature so the (H, N) path is one FMA.
    scale = jnp.sqrt(xih + 1e-8) / a                 # (Bt, 1, N)
    offset = phih - b * scale                        # (Bt, 1, N)
    o_ref[...] = (x * scale + offset).astype(o_ref.dtype)


# ----------------------------------------------------------------------------
# Wrappers
# ----------------------------------------------------------------------------
def _pick_bt(B, L, N, itemsize, target_bytes=2 << 20, min_grid_steps=2):
    """Largest divisor of B whose (Bt, L, N) block stays under target_bytes,
    keeping the grid >= min_grid_steps when possible (v7x 2-TC balance).
    2 MiB blocks sit in the measured ~85%-of-roofline region and fit the
    default scoped-VMEM limits of v5e/v6e/v7x with double-buffering."""
    per_batch = max(1, L * N * itemsize)
    cap = max(1, target_bytes // per_batch)
    if B >= min_grid_steps:
        cap = min(cap, B // min_grid_steps)
    bt = 1
    for d in range(1, B + 1):
        if B % d == 0 and d <= cap:
            bt = d
    return bt


def dishts_forward(x, reduce_layer, a, b, *, activate=False,
                   emit_inverse_stats=False, target_block_bytes=2 << 20):
    """x: (B, L, N); reduce_layer: (N, L, 2); a, b: (N,).

    Returns y (B, L, N), or (y, (phil, phih, xil, xih)) each (B, 1, N) when
    emit_inverse_stats=True (the module's stored state for the inverse path).
    """
    B, L, N = x.shape
    dtype = x.dtype
    itemsize = jnp.dtype(dtype).itemsize

    Bt = _pick_bt(B, L, N, itemsize, target_block_bytes)
    grid = (B // Bt,)

    # (N, L, 2) -> (2, L, N); hot path only needs w[0].
    w = jnp.transpose(reduce_layer, (2, 1, 0)).astype(dtype)   # (2, L, N)
    ab = jnp.stack([a, b]).astype(dtype)                       # (2, N)

    denom = L - 1
    # Multiplying by inf reproduces the torch divide-by-zero behaviour at L==1.
    inv_ts = (1.0 / denom) if denom > 0 else float("inf")

    x_spec = pl.BlockSpec((Bt, L, N), lambda i: (i, 0, 0))
    y_spec = pl.BlockSpec((Bt, L, N), lambda i: (i, 0, 0))
    ab_spec = pl.BlockSpec((2, N), lambda i: (0, 0))

    flops_per_elem = 10 if emit_inverse_stats else 6
    cost = pl.CostEstimate(
        flops=int(flops_per_elem * B * L * N),
        transcendentals=int(B * N * (2 if emit_inverse_stats else 1)),
        bytes_accessed=int((2 * B * L * N + 2 * L * N + 2 * N
                            + (4 * B * N if emit_inverse_stats else 0)) * itemsize),
    )
    params = pltpu.CompilerParams(dimension_semantics=("parallel",))

    if not emit_inverse_stats:
        kernel = functools.partial(_dishts_fwd_kernel,
                                   inv_ts=inv_ts, activate=activate)
        return pl.pallas_call(
            kernel,
            out_shape=jax.ShapeDtypeStruct((B, L, N), dtype),
            grid_spec=pltpu.PrefetchScalarGridSpec(
                num_scalar_prefetch=0,
                grid=grid,
                in_specs=[x_spec,
                          pl.BlockSpec((L, N), lambda i: (0, 0)),   # w0
                          ab_spec],
                out_specs=y_spec,
            ),
            compiler_params=params,
            cost_estimate=cost,
        )(x, w[0], ab)

    kernel = functools.partial(_dishts_fwd_stats_kernel,
                               inv_ts=inv_ts, activate=activate)
    y, stats = pl.pallas_call(
        kernel,
        out_shape=(jax.ShapeDtypeStruct((B, L, N), dtype),
                   jax.ShapeDtypeStruct((B, 4, N), dtype)),
        grid_spec=pltpu.PrefetchScalarGridSpec(
            num_scalar_prefetch=0,
            grid=grid,
            in_specs=[x_spec,
                      pl.BlockSpec((2, L, N), lambda i: (0, 0, 0)),  # w0|w1
                      ab_spec],
            out_specs=[y_spec,
                       pl.BlockSpec((Bt, 4, N), lambda i: (i, 0, 0))],
        ),
        compiler_params=params,
        cost_estimate=cost,
    )(x, w, ab)

    phil = stats[:, 0:1, :]
    phih = stats[:, 1:2, :]
    xil = stats[:, 2:3, :]
    xih = stats[:, 3:4, :]
    return y, (phil, phih, xil, xih)


def dishts_inverse(x, phih, xih, a, b, *, target_block_bytes=2 << 20):
    """Inverse branch of forward(): x: (B, H, N); phih, xih: (B, 1, N)."""
    B, H, N = x.shape
    dtype = x.dtype
    itemsize = jnp.dtype(dtype).itemsize

    Bt = _pick_bt(B, H, N, itemsize, target_block_bytes)
    grid = (B // Bt,)

    ab = jnp.stack([a, b]).astype(dtype)                        # (2, N)
    phih = phih.astype(dtype)
    xih = xih.astype(dtype)

    cost = pl.CostEstimate(
        flops=int(4 * B * H * N),
        transcendentals=int(B * N),
        bytes_accessed=int((2 * B * H * N + 2 * B * N + 2 * N) * itemsize),
    )

    return pl.pallas_call(
        _dishts_inv_kernel,
        out_shape=jax.ShapeDtypeStruct((B, H, N), dtype),
        grid_spec=pltpu.PrefetchScalarGridSpec(
            num_scalar_prefetch=0,
            grid=grid,
            in_specs=[pl.BlockSpec((Bt, H, N), lambda i: (i, 0, 0)),
                      pl.BlockSpec((Bt, 1, N), lambda i: (i, 0, 0)),
                      pl.BlockSpec((Bt, 1, N), lambda i: (i, 0, 0)),
                      pl.BlockSpec((2, N), lambda i: (0, 0))],
            out_specs=pl.BlockSpec((Bt, H, N), lambda i: (i, 0, 0)),
        ),
        compiler_params=pltpu.CompilerParams(dimension_semantics=("parallel",)),
        cost_estimate=cost,
    )(x, phih, xih, ab)


# ----------------------------------------------------------------------------
# Pure-JAX references (transcription of the PyTorch module)
# ----------------------------------------------------------------------------
def dishts_reference(x, reduce_layer, a, b, *, activate=False):
    B, L, N = x.shape
    xT = jnp.transpose(x, (2, 0, 1))                          # (N, B, L)
    theta = jnp.einsum("nbl,nlk->nbk", xT, reduce_layer)      # (N, B, 2)
    theta = jnp.transpose(theta, (1, 2, 0))                   # (B, 2, N)
    if activate:
        theta = jax.nn.gelu(theta, approximate=False)
    phil = theta[:, 0:1, :]
    phih = theta[:, 1:2, :]
    ts = L - 1
    xil = jnp.sum((x - phil) ** 2, axis=1, keepdims=True) / ts
    xih = jnp.sum((x - phih) ** 2, axis=1, keepdims=True) / ts
    y = (x - phil) / jnp.sqrt(xil + 1e-8)
    y = y * a + b
    return y, phil, phih, xil, xih


def dishts_inverse_reference(x, phih, xih, a, b):
    return (x - b) / a * jnp.sqrt(xih + 1e-8) + phih


if __name__ == "__main__":
    B, L, N = 4, 8, 4     # batch, lookback, input_size
    H = 6                 # forecast horizon for the inverse path

    key = jax.random.PRNGKey(0)
    k_x, k_w, k_f = jax.random.split(key, 3)

    x = jax.random.normal(k_x, (B, L, N), dtype=jnp.float32)
    # Matches nn.Parameter shapes: randn(input_size, lookback, 2) / lookback,
    # a = ones(input_size), b = zeros(input_size).
    reduce_layer = jax.random.normal(k_w, (N, L, 2), dtype=jnp.float32) / L
    a = jnp.ones((N,), dtype=jnp.float32)
    b = jnp.zeros((N,), dtype=jnp.float32)

    y_ref, phil_r, phih_r, xil_r, xih_r = dishts_reference(
        x, reduce_layer, a, b, activate=False)

    # Forward hot path (y only).
    y = dishts_forward(x, reduce_layer, a, b, activate=False)
    y = jax.block_until_ready(y)
    assert y.shape == (B, L, N)
    assert jnp.allclose(y, y_ref, atol=1e-5, rtol=1e-5), "y mismatch (hot path)"

    # Stats path (module state for the inverse branch).
    y2, (phil, phih, xil, xih) = dishts_forward(
        x, reduce_layer, a, b, activate=False, emit_inverse_stats=True)
    jax.block_until_ready(y2)
    assert jnp.allclose(y2, y_ref, atol=1e-5, rtol=1e-5), "y mismatch (stats path)"
    assert jnp.allclose(phil, phil_r, atol=1e-5, rtol=1e-5), "phil mismatch"
    assert jnp.allclose(phih, phih_r, atol=1e-5, rtol=1e-5), "phih mismatch"
    assert jnp.allclose(xil, xil_r, atol=1e-5, rtol=1e-5), "xil mismatch"
    assert jnp.allclose(xih, xih_r, atol=1e-5, rtol=1e-5), "xih mismatch"

    # Inverse branch of forward() (denormalize a forecast with stored stats).
    x_fut = jax.random.normal(k_f, (B, H, N), dtype=jnp.float32)
    x_inv = dishts_inverse(x_fut, phih, xih, a, b)
    x_inv = jax.block_until_ready(x_inv)
    x_inv_ref = dishts_inverse_reference(x_fut, phih_r, xih_r, a, b)
    assert x_inv.shape == (B, H, N)
    assert jnp.allclose(x_inv, x_inv_ref, atol=1e-5, rtol=1e-5), "inverse mismatch"

    # activate=True path (exact gelu on the tiny (Bt,1,N) theta).
    y3 = dishts_forward(x, reduce_layer, a, b, activate=True)
    y3_ref, *_ = dishts_reference(x, reduce_layer, a, b, activate=True)
    jax.block_until_ready(y3)
    assert jnp.allclose(y3, y3_ref, atol=1e-5, rtol=1e-5), "y mismatch (activate)"

    print("KERNEL_OK")
</pallas_src>

<mosaic_0001>
module attributes {stable_mosaic.version = 11 : i64} {
  func.func @_dishts_fwd_kernel(%arg0: i32, %arg1: memref<2x8x4xf32, #tpu.memory_space<vmem>>, %arg2: memref<8x4xf32, #tpu.memory_space<vmem>>, %arg3: memref<2x4xf32, #tpu.memory_space<vmem>>, %arg4: memref<2x8x4xf32, #tpu.memory_space<vmem>>) attributes {dimension_semantics = [#tpu.dimension_semantics<parallel>], iteration_bounds = array<i64: 2>, scalar_prefetch = 0 : i64, scratch_operands = 0 : i64, tpu.core_type = #tpu.core_type<tc>, window_params = [{transform_indices = @transform_0, window_bounds = array<i64: 2, 8, 4>}, {pipeline_mode = #tpu.pipeline_mode<synchronous>, transform_indices = @transform_1, window_bounds = array<i64: 8, 4>}, {pipeline_mode = #tpu.pipeline_mode<synchronous>, transform_indices = @transform_2, window_bounds = array<i64: 2, 4>}, {transform_indices = @transform_3, window_bounds = array<i64: 2, 8, 4>}]} {
    %c0 = arith.constant 0 : index
    %c0_0 = arith.constant 0 : index
    %c0_1 = arith.constant 0 : index
    %0 = vector.load %arg1[%c0, %c0_0, %c0_1] : memref<2x8x4xf32, #tpu.memory_space<vmem>>, vector<2x8x4xf32>
    %c0_2 = arith.constant 0 : index
    %c0_3 = arith.constant 0 : index
    %1 = vector.load %arg2[%c0_2, %c0_3] : memref<8x4xf32, #tpu.memory_space<vmem>>, vector<8x4xf32>
    %2 = vector.shape_cast %1 : vector<8x4xf32> to vector<1x8x4xf32>
    %3 = vector.broadcast %2 : vector<1x8x4xf32> to vector<2x8x4xf32>
    %4 = arith.mulf %0, %3 : vector<2x8x4xf32>
    %cst = arith.constant dense<0.000000e+00> : vector<2x4xf32>
    %5 = vector.multi_reduction <add>, %4, %cst [1] : vector<2x8x4xf32> to vector<2x4xf32>
    %6 = vector.shape_cast %5 : vector<2x4xf32> to vector<2x1x4xf32>
    %7 = vector.broadcast %6 : vector<2x1x4xf32> to vector<2x8x4xf32>
    %8 = arith.subf %0, %7 : vector<2x8x4xf32>
    %9 = arith.mulf %8, %8 : vector<2x8x4xf32>
    %cst_4 = arith.constant dense<0.000000e+00> : vector<2x4xf32>
    %10 = vector.multi_reduction <add>, %9, %cst_4 [1] : vector<2x8x4xf32> to vector<2x4xf32>
    %11 = vector.shape_cast %10 : vector<2x4xf32> to vector<2x1x4xf32>
    %cst_5 = arith.constant 0.142857149 : f32
    %12 = vector.broadcast %cst_5 : f32 to vector<2x1x4xf32>
    %13 = arith.mulf %11, %12 : vector<2x1x4xf32>
    %c0_6 = arith.constant 0 : index
    %c0_7 = arith.constant 0 : index
    %14 = vector.load %arg3[%c0_6, %c0_7] : memref<2x4xf32, #tpu.memory_space<vmem>>, vector<1x4xf32>
    %c1 = arith.constant 1 : index
    %c0_8 = arith.constant 0 : index
    %15 = vector.load %arg3[%c1, %c0_8] : memref<2x4xf32, #tpu.memory_space<vmem>>, vector<1x4xf32>
    %cst_9 = arith.constant 9.99999993E-9 : f32
    %16 = vector.broadcast %cst_9 : f32 to vector<2x1x4xf32>
    %17 = arith.addf %13, %16 : vector<2x1x4xf32>
    %18 = math.rsqrt %17 : vector<2x1x4xf32>
    %19 = vector.shape_cast %14 : vector<1x4xf32> to vector<1x1x4xf32>
    %20 = vector.broadcast %19 : vector<1x1x4xf32> to vector<2x1x4xf32>
    %21 = arith.mulf %18, %20 : vector<2x1x4xf32>
    %22 = vector.broadcast %21 : vector<2x1x4xf32> to vector<2x8x4xf32>
    %23 = arith.mulf %8, %22 : vector<2x8x4xf32>
    %24 = vector.shape_cast %15 : vector<1x4xf32> to vector<1x1x4xf32>
    %25 = vector.broadcast %24 : vector<1x1x4xf32> to vector<2x8x4xf32>
    %26 = arith.addf %23, %25 : vector<2x8x4xf32>
    %c0_10 = arith.constant 0 : index
    %c0_11 = arith.constant 0 : index
    %c0_12 = arith.constant 0 : index
    %27 = vector.load %arg4[%c0_10, %c0_11, %c0_12] : memref<2x8x4xf32, #tpu.memory_space<vmem>>, vector<2x8x4xf32>
    tpu.vector_store %arg4[%c0_10, %c0_11, %c0_12], %26 {strides = array<i32>} : memref<2x8x4xf32, #tpu.memory_space<vmem>>, vector<2x8x4xf32>,
    return
  }
  func.func @transform_0(%arg0: i32) -> (i32, i32, i32) {
    %c0_i32 = arith.constant 0 : i32
    %c0_i32_0 = arith.constant 0 : i32
    %c0_i32_1 = arith.constant 0 : i32
    return %arg0, %c0_i32, %c0_i32_0 : i32, i32, i32
  }
  func.func @transform_1(%arg0: i32) -> (i32, i32) {
    %c0_i32 = arith.constant 0 : i32
    %c0_i32_0 = arith.constant 0 : i32
    %c0_i32_1 = arith.constant 0 : i32
    return %c0_i32, %c0_i32_0 : i32, i32
  }
  func.func @transform_2(%arg0: i32) -> (i32, i32) {
    %c0_i32 = arith.constant 0 : i32
    %c0_i32_0 = arith.constant 0 : i32
    %c0_i32_1 = arith.constant 0 : i32
    return %c0_i32, %c0_i32_0 : i32, i32
  }
  func.func @transform_3(%arg0: i32) -> (i32, i32, i32) {
    %c0_i32 = arith.constant 0 : i32
    %c0_i32_0 = arith.constant 0 : i32
    %c0_i32_1 = arith.constant 0 : i32
    return %arg0, %c0_i32, %c0_i32_0 : i32, i32, i32
  }
}

</mosaic_0001>

<llo_original>
// kernel: tpu_custom_call.1
$region0: #{tpu_custom_call.1}
  #allocation0 [shape = 'u32[]', space=smem, size = 0x4, offset = 0x4, fixed_abs, tag = 'smem constant byte address 0x4 - core index']
  #allocation1 [shape = 'u32[144,128]{1,0:T(1,128)}', space=vmem, size = 0x12000, scoped, tag = 'internal scratch']
  %s0 = inlined_call_operand.vmem [shape: f32[4,8,4], index: 0, kind: input, shape index: {}]
  %s1 = inlined_call_operand.vmem [shape: f32[8,4], index: 1, kind: input, shape index: {}]
  %s2 = inlined_call_operand.vmem [shape: f32[2,4], index: 2, kind: input, shape index: {}]
  %s3 = inlined_call_operand.vmem [shape: f32[4,8,4], index: 3, kind: output, shape index: {}]
  %s4 = sld [smem:[#allocation0]]
  $region45: #{tpu_custom_call.1} parent=0
    _
  %s6 = ssub.s32 1, %s4
  %s7 = scalar_select 0, %s6, %s4
  loop: start=0, step=1, limit=4
  $region2: #{tpu_custom_call.1} parent=0 // loop_pre_header
    _
  $region3: #{tpu_custom_call.1} parent=0 // loop_header
    %s9 = sphi 0, %s13
    %p10 = scmp.ge.s32.totalorder %s9, 4
    %s19 = sphi 0, %s21
    %s22 = sphi 0, %s19
    %s23 = sphi 0, %s22
    %s39 = sphi 0, %s23
    %s43 = sphi 0, %s43
    %s45 = sphi 0, %s43
    %s46 = sphi 0, %s45
    %s60 = sphi 0, %s46
    %s64 = sphi 0, %s64
    %s66 = sphi 0, %s64
    %s67 = sphi 0, %s66
    %s81 = sphi 0, %s67
    %s87 = sphi 0, %s89
    %s90 = sphi 0, %s87
    %s91 = sphi 0, %s90
    %s107 = sphi 0, %s91
  $region4: #{tpu_custom_call.1} parent=0 // loop_header_branch
    %12 = sbr.rel (%p10) target = $region8
  $region5: #{tpu_custom_call.1} parent=0 // loop_body
    %s14 = ssub.s32 %s9, 1
    %s15 = ssub.s32 %s9, 2
    %s16 = sadd.s32 %s9, 1
    %s17 = ssub.s32 %s9, %s16
    %p18 = scmp.eq.s32.totalorder %s17, 0
    %s20 = sadd.s32 %s19, 1
    %s21 = scalar_select %p18, %s19, %s20
    %p24 = pneg %p18
    %p25 = scmp.eq.s32.totalorder %s9, 1
    %p26 = por %p24, %p25
    %p27 = scmp.ne.s32.totalorder %s19, %s22
    %p28 = scmp.eq.s32.totalorder %s9, 0
    %p29 = por %p27, %p28
    %p30 = scmp.ne.s32.totalorder %s19, %s22
    %p31 = scmp.eq.s32.totalorder %s14, 1
    %p32 = por %p30, %p31
    %p33 = scmp.ne.s32.totalorder %s22, %s23
    %p34 = scmp.eq.s32.totalorder %s14, 0
    %p35 = por %p33, %p34
    %p36 = scmp.ne.s32.totalorder %s22, %s23
    %p37 = scmp.eq.s32.totalorder %s15, 1
    %p38 = por %p36, %p37
    %p40 = scmp.ne.s32.totalorder %s23, %s39
    %p41 = scmp.eq.s32.totalorder %s15, 0
    %p42 = por %p40, %p41
    %s44 = sadd.s32 %s43, 1
    %p47 = scmp.eq.s32.totalorder %s9, 1
    %p48 = scmp.ne.s32.totalorder %s43, %s45
    %p49 = scmp.eq.s32.totalorder %s9, 0
    %p50 = por %p48, %p49
    %p51 = scmp.ne.s32.totalorder %s43, %s45
    %p52 = scmp.eq.s32.totalorder %s14, 1
    %p53 = por %p51, %p52
    %p54 = scmp.ne.s32.totalorder %s45, %s46
    %p55 = scmp.eq.s32.totalorder %s14, 0
    %p56 = por %p54, %p55
    %p57 = scmp.ne.s32.totalorder %s45, %s46
    %p58 = scmp.eq.s32.totalorder %s15, 1
    %p59 = por %p57, %p58
    %p61 = scmp.ne.s32.totalorder %s46, %s60
    %p62 = scmp.eq.s32.totalorder %s15, 0
    %p63 = por %p61, %p62
    %s65 = sadd.s32 %s64, 1
    %p68 = scmp.eq.s32.totalorder %s9, 1
    %p69 = scmp.ne.s32.totalorder %s64, %s66
    %p70 = scmp.eq.s32.totalorder %s9, 0
    %p71 = por %p69, %p70
    %p72 = scmp.ne.s32.totalorder %s64, %s66
    %p73 = scmp.eq.s32.totalorder %s14, 1
    %p74 = por %p72, %p73
    %p75 = scmp.ne.s32.totalorder %s66, %s67
    %p76 = scmp.eq.s32.totalorder %s14, 0
    %p77 = por %p75, %p76
    %p78 = scmp.ne.s32.totalorder %s66, %s67
    %p79 = scmp.eq.s32.totalorder %s15, 1
    %p80 = por %p78, %p79
    %p82 = scmp.ne.s32.totalorder %s67, %s81
    %p83 = scmp.eq.s32.totalorder %s15, 0
    %p84 = por %p82, %p83
    %s85 = ssub.s32 %s9, %s16
    %p86 = scmp.eq.s32.totalorder %s85, 0
    %s88 = sadd.s32 %s87, 1
    %s89 = scalar_select %p86, %s87, %s88
    %p92 = pneg %p86
    %p93 = scmp.eq.s32.totalorder %s9, 1
    %p94 = por %p92, %p93
    %p95 = scmp.ne.s32.totalorder %s87, %s90
    %p96 = scmp.eq.s32.totalorder %s9, 0
    %p97 = por %p95, %p96
    %p98 = scmp.ne.s32.totalorder %s87, %s90
    %p99 = scmp.eq.s32.totalorder %s14, 1
    %p100 = por %p98, %p99
    %p101 = scmp.ne.s32.totalorder %s90, %s91
    %p102 = scmp.eq.s32.totalorder %s14, 0
    %p103 = por %p101, %p102
    %p104 = scmp.ne.s32.totalorder %s90, %s91
    %p105 = scmp.eq.s32.totalorder %s15, 1
    %p106 = por %p104, %p105
    %p108 = scmp.ne.s32.totalorder %s91, %s107
    %p109 = scmp.eq.s32.totalorder %s15, 0
    %p110 = por %p108, %p109
    %p111 = scmp.le.s32.totalorder 1, %s9
    %p112 = scmp.lt.s32.totalorder %s9, 3
    %p113 = pnand %p111, %p112
    %p114 = pneg %p113
    // Predicated region
    $region9: #{tpu_custom_call.1} parent=5 // pred_check
      _
    $region10: #{tpu_custom_call.1} parent=5 // pred_check_branch
      %116 = sbr.rel (%p113) target = $region12
    $region11: #{tpu_custom_call.1} parent=5 // pred_region
      %s117 = ssub.s32 %s9, 1
      // Predicated region
      $region13: #{tpu_custom_call.1} parent=11 // pred_check
        %p118 = pneg %p56
      $region14: #{tpu_custom_call.1} parent=11 // pred_check_branch
        %120 = sbr.rel (%p118) target = $region16
      $region15: #{tpu_custom_call.1} parent=11 // pred_region
        _
      $region16: #{tpu_custom_call.1} parent=11 // pred_fallthru
        _
      // Predicated region
      $region17: #{tpu_custom_call.1} parent=11 // pred_check
        %p121 = pneg %p77
      $region18: #{tpu_custom_call.1} parent=11 // pred_check_branch
        %123 = sbr.rel (%p121) target = $region20
      $region19: #{tpu_custom_call.1} parent=11 // pred_region
        _
      $region20: #{tpu_custom_call.1} parent=11 // pred_fallthru
        _
    $region12: #{tpu_custom_call.1} parent=5 // pred_fallthru
      _
    %p124 = scmp.lt.s32.totalorder %s9, 2
    // Predicated region
    $region21: #{tpu_custom_call.1} parent=5 // pred_check
      %p125 = pneg %p124
    $region22: #{tpu_custom_call.1} parent=5 // pred_check_branch
      %127 = sbr.rel (%p125) target = $region24
    $region23: #{tpu_custom_call.1} parent=5 // pred_region
      // Predicated region
      $region25: #{tpu_custom_call.1} parent=23 // pred_check
        %p128 = pneg %p29
      $region26: #{tpu_custom_call.1} parent=23 // pred_check_branch
        %130 = sbr.rel (%p128) target = $region28
      $region27: #{tpu_custom_call.1} parent=23 // pred_region
        %s131 = smul.u32 2, %s9
        %p132 = scmp.lt.s32.totalorder %s131, 3
        %s133 = scalar_select %p132, %s131, 3
        %s134 = smul.addr %s133, 8
        %s135 = scalar_lea.vmem %s0, %s134
        %s136 = smul.u32 2, %s9
      $region28: #{tpu_custom_call.1} parent=23 // pred_fallthru
        _
    $region24: #{tpu_custom_call.1} parent=5 // pred_fallthru
      _
    %p137 = scmp.le.s32.totalorder 1, %s9
    %p138 = scmp.lt.s32.totalorder %s9, 3
    %p139 = pnand %p137, %p138
    %p140 = pneg %p139
    // Predicated region
    $region29: #{tpu_custom_call.1} parent=5 // pred_check
      _
    $region30: #{tpu_custom_call.1} parent=5 // pred_check_branch
      %142 = sbr.rel (%p139) target = $region32
    $region31: #{tpu_custom_call.1} parent=5 // pred_region
      %s143 = ssub.s32 %s9, 1
      %s144 = smul.u32 2, %s14
      %p145 = scmp.lt.s32.totalorder %s144, 3
      %s146 = scalar_select %p145, %s144, 3
      %s147 = smul.addr %s146, 8
      %s148 = scalar_lea.vmem %s0, %s147
      %p149 = pneg %p35
      %p150 = pneg %p32
      %p151 = pneg %p56
      %p152 = pneg %p53
      %p153 = pneg %p77
      %p154 = pneg %p74
      %p155 = pneg %p103
      %p156 = pneg %p100
      %s157 = smul.u32 2, %s14
      %p158 = scmp.lt.s32.totalorder %s157, 3
      %s159 = scalar_select %p158, %s157, 3
      %s160 = smul.addr %s159, 8
      %s161 = scalar_lea.vmem %s3, %s160
      %s162 = smul.u32 2, %s14
      %p163 = scmp.lt.s32.totalorder %s162, 3
      %s164 = scalar_select %p163, %s162, 3
      %s165 = smul.addr %s164, 8
      %s166 = scalar_lea.vmem %s0, %s165
      %s167 = smul.u32 2, %s14
      %s168 = smul.u32 2, %s14
      %p169 = scmp.lt.s32.totalorder %s168, 3
      %s170 = scalar_select %p169, %s168, 3
      %s171 = smul.addr %s170, 8
      %s172 = scalar_lea.vmem %s3, %s171
      %s173 = smul.u32 2, %s14
      %v174 = vld [vmem:[%s166] sm:$0xff]
      %v175 = vld [vmem:[%s166 + $0x8] sm:$0xff]
      %v176 = vld [vmem:[%s1] sm:$0xff]
      %v177 = vmul.f32 %v174, %v176
      %v178 = vmul.f32 %v175, %v176
      %vm179 = vcmask 31744
      %v180 = vsel %vm179, %v177, 0.0
      %v181 = vrot.slane %v180, 4
      %v182 = vadd.f32 %v180, %v181
      %v183 = vrot.slane %v182, 2
      %v184 = vadd.f32 %v182, %v183
      %v185 = vrot.slane %v184, 1
      %v186 = vadd.f32 %v184, %v185
      %v187 = vsel %vm179, %v178, 0.0
      %v188 = vrot.slane %v187, 4
      %v189 = vadd.f32 %v187, %v188
      %v190 = vrot.slane %v189, 2
      %v191 = vadd.f32 %v189, %v190
      %v192 = vrot.slane %v191, 1
      %v193 = vadd.f32 %v191, %v192
      %v194 = vsub.f32 %v174, %v186
      %v195 = vsub.f32 %v175, %v193
      %v196 = vmul.f32 %v194, %v194
      %v197 = vmul.f32 %v195, %v195
      %v198 = vsel %vm179, %v196, 0.0
      %v199 = vrot.slane %v198, 4
      %v200 = vadd.f32 %v198, %v199
      %v201 = vrot.slane %v200, 2
      %v202 = vadd.f32 %v200, %v201
      %v203 = vrot.slane %v202, 1
      %v204 = vadd.f32 %v202, %v203
      %v205 = vsel %vm179, %v197, 0.0
      %v206 = vrot.slane %v205, 4
      %v207 = vadd.f32 %v205, %v206
      %v208 = vrot.slane %v207, 2
      %v209 = vadd.f32 %v207, %v208
      %v210 = vrot.slane %v209, 1
      %v211 = vadd.f32 %v209, %v210
      %v212 = vmul.f32 %v204, 0.14285715
      %v213 = vmul.f32 %v211, 0.14285715
      %v214 = vld [vmem:[%s2] sm:$0x1]
      %v215 = vld [vmem:[%s2 + $0x1] sm:$0x1]
      %v216 = vadd.f32 %v212, 1e-08
      %v217 = vadd.f32 %v213, 1e-08
      %v218 = vrsqrt.pop %v216
      %v219 = vrsqrt.pop %v217
      %v220 = vmul.f32 %v218, %v214
      %v221 = vmul.f32 %v219, %v214
      %v222 = vlaneseq
      %v223 = vshrl.u32 %v222, 7
      %v224 = vsub.s32 0, %v223
      %v225 = vrot.slane %v220, %v224
      %v226 = vlaneseq
      %v227 = vshrl.u32 %v226, 7
      %v228 = vsub.s32 0, %v227
      %v229 = vrot.slane %v221, %v228
      %v230 = vmul.f32 %v194, %v225
      %v231 = vmul.f32 %v195, %v229
      %v232 = vlaneseq
      %v233 = vshrl.u32 %v232, 7
      %v234 = vsub.s32 0, %v233
      %v235 = vrot.slane %v215, %v234
      %v236 = vadd.f32 %v230, %v235
      %v237 = vadd.f32 %v231, %v235
      %238 = vst.msk [vmem:[%s172] sm:$0xff] %vm179, %v236
      %239 = vst.msk [vmem:[%s172 + $0x8] sm:$0xff] %vm179, %v237
      %s240 = smul.u32 2, %s14
      %p241 = scmp.lt.s32.totalorder %s240, 3
      %s242 = scalar_select %p241, %s240, 3
      %s243 = smul.addr %s242, 8
      %s244 = scalar_lea.vmem %s3, %s243
      // Predicated region
      $region33: #{tpu_custom_call.1} parent=31 // pred_check
        %p245 = pneg %p100
      $region34: #{tpu_custom_call.1} parent=31 // pred_check_branch
        %247 = sbr.rel (%p245) target = $region36
      $region35: #{tpu_custom_call.1} parent=31 // pred_region
        %s248 = smul.u32 2, %s14
      $region36: #{tpu_custom_call.1} parent=31 // pred_fallthru
        _
    $region32: #{tpu_custom_call.1} parent=5 // pred_fallthru
      _
    %p249 = scmp.le.s32.totalorder 2, %s9
    // Predicated region
    $region37: #{tpu_custom_call.1} parent=5 // pred_check
      %p250 = pneg %p249
    $region38: #{tpu_custom_call.1} parent=5 // pred_check_branch
      %252 = sbr.rel (%p250) target = $region40
    $region39: #{tpu_custom_call.1} parent=5 // pred_region
      %s253 = ssub.s32 %s9, 2
      // Predicated region
      $region41: #{tpu_custom_call.1} parent=39 // pred_check
        %p254 = pneg %p106
      $region42: #{tpu_custom_call.1} parent=39 // pred_check_branch
        %256 = sbr.rel (%p254) target = $region44
      $region43: #{tpu_custom_call.1} parent=39 // pred_region
        %s257 = smul.u32 2, %s15
        %p258 = scmp.lt.s32.totalorder %s257, 3
        %s259 = scalar_select %p258, %s257, 3
        %s260 = smul.addr %s259, 8
        %s261 = scalar_lea.vmem %s3, %s260
      $region44: #{tpu_custom_call.1} parent=39 // pred_fallthru
        _
    $region40: #{tpu_custom_call.1} parent=5 // pred_fallthru
      _
  $region6: #{tpu_custom_call.1} parent=0 // loop_footer
    %s13 = sadd.s32 1, %s9
  $region7: #{tpu_custom_call.1} parent=0 // loop_footer_branch
    %8 = sbr.rel target = $region3
  $region8: #{tpu_custom_call.1} parent=0 // loop_exit
    _

</llo_original>
